<compile_context>
chip_gen: v6e
topology: v6e:2x2x1
jax: 0.10.0
libtpu: 0.0.40
codegen_flags: <defaults>
</compile_context>

<pallas_src>
import math

import jax
import jax.numpy as jnp
from jax import lax
from jax.experimental import pallas as pl
from jax.experimental.pallas import tpu as pltpu


def _round_up(v, m):
    return -(-v // m) * m


def _make_kernel(TN, C, HW, hw_tile, hw_blocks, inv_hw):
    mask_last = (HW % hw_tile) != 0
    cw = 128 if hw_tile % 128 == 0 else hw_tile      # chunk width (lanes)
    n_chunks = hw_tile // cw
    last_idx = hw_blocks - 1
    rem = HW - last_idx * hw_tile                    # valid lanes in the last tile
    neg_inf = float("-inf")

    def accum_chunk(x_ref, sum_acc, max_acc, k, valid_lanes):
        # One lane-wide slab: pure VPU add/max against the (TN, C, cw) accumulators.
        x = x_ref[:, :, pl.ds(k * cw, cw)].astype(jnp.float32)   # (TN, C, cw)
        if valid_lanes < cw:                                     # masked tail chunk only
            lane = lax.broadcasted_iota(jnp.int32, (1, 1, cw), 2)
            ok = lane < valid_lanes
            sum_acc[...] += jnp.where(ok, x, 0.0)
            max_acc[...] = jnp.maximum(max_acc[...], jnp.where(ok, x, neg_inf))
        else:
            sum_acc[...] += x
            max_acc[...] = jnp.maximum(max_acc[...], x)

    def kernel(x_ref, w1_ref, w2_ref, o_ref, sum_acc, max_acc):
        # x_ref: (TN, C, hw_tile)   w1_ref: (C, Cr)   w2_ref: (Cr, C)
        # o_ref: (TN, 1, C)         sum_acc/max_acc: (TN, C, cw) f32 scratch
        hw_i = pl.program_id(1)

        @pl.when(hw_i == 0)
        def _init():
            sum_acc[...] = jnp.zeros_like(sum_acc)
            max_acc[...] = jnp.full_like(max_acc, neg_inf)

        def full_tile():
            for k in range(n_chunks):
                accum_chunk(x_ref, sum_acc, max_acc, k, cw)

        if not mask_last:
            full_tile()                                          # unmasked on every step
        else:
            if hw_blocks > 1:
                @pl.when(hw_i < last_idx)
                def _body():                                     # unmasked fast path
                    full_tile()

            @pl.when(hw_i == last_idx)
            def _last():                                         # mask only the tail chunk
                full_chunks = rem // cw
                for k in range(full_chunks):
                    accum_chunk(x_ref, sum_acc, max_acc, k, cw)
                tail = rem - full_chunks * cw
                if tail:
                    accum_chunk(x_ref, sum_acc, max_acc, full_chunks, tail)

        @pl.when(hw_i == last_idx)
        def _finalize():
            # Single cross-lane reduce of the lane-wide partials.
            avg = jnp.sum(sum_acc[...], axis=-1) * inv_hw        # (TN, C)
            mx = jnp.max(max_acc[...], axis=-1)                  # (TN, C)
            # Shared MLP (two 1x1 convs == two matmuls) on both pooled operands at
            # once; runs once per N block, so MXU utilization here is irrelevant.
            pooled = jnp.concatenate([avg, mx], axis=0)          # (2*TN, C)
            h = jnp.maximum(
                jnp.dot(pooled, w1_ref[...], preferred_element_type=jnp.float32),
                0.0)                                             # ReLU
            y = jnp.dot(h, w2_ref[...], preferred_element_type=jnp.float32)
            attn = jax.nn.sigmoid(y[:TN] + y[TN:])               # (TN, C)
            o_ref[...] = attn.reshape(TN, 1, C).astype(o_ref.dtype)

    return kernel


def _choose_tiling(N, C, HW, itemsize, n_tile, hw_tile):
    # --- spatial tile: lane-dense multiple of 128, targeting multi-MiB blocks ---
    if hw_tile is None:
        if HW <= 128:
            hw_tile = HW
        else:
            target = 4 << 20                                     # ~4 MiB x block at TN=8
            cap = (target // max(8 * C * itemsize, 1)) // 128 * 128
            cap = max(512, min(4096, cap))
            hw_tile = min(_round_up(HW, 128), cap)
    else:
        hw_tile = int(hw_tile)
        if hw_tile != HW and hw_tile % 128 != 0:
            hw_tile = _round_up(hw_tile, 128)                    # keep lane constraint

    # --- batch tile ---
    if n_tile is None:
        TN = min(N, 8)
        block_bytes = TN * C * hw_tile * itemsize
        # Grow TN (small-C inputs) while blocks are small and >=2 N blocks remain.
        while (block_bytes < (2 << 20) and TN * 2 <= 32 and TN * 2 <= N
               and -(-N // (TN * 2)) >= 2):
            TN *= 2
            block_bytes *= 2
        # Keep >=2 parallel N blocks whenever N allows it, so both v7x TensorCores
        # (and both halves of its HBM bandwidth) get work; costs one extra tiny
        # finalize on single-core generations.
        if -(-N // TN) == 1 and N >= 2:
            TN = -(-N // 2)
    else:
        TN = int(n_tile)

    return TN, hw_tile


def channel_attention(x, w1_conv, w2_conv, *, n_tile=None, hw_tile=None):
    """CBAM channel attention.

    x: (N, C, H, W).  w1_conv: (Cr, C, 1, 1), w2_conv: (C, Cr, 1, 1) (1x1 convs, no bias).
    Returns sigmoid(MLP(avg_pool(x)) + MLP(max_pool(x))) with shape (N, C, 1, 1).
    """
    N, C, H, W = x.shape
    Cr = w1_conv.shape[0]
    HW = H * W
    itemsize = jnp.dtype(x.dtype).itemsize

    # 1x1 convs on a (N, C, 1, 1) tensor == matmuls on (N, C) with transposed weights.
    w1 = jnp.transpose(w1_conv[:, :, 0, 0]).astype(jnp.float32)   # (C, Cr)
    w2 = jnp.transpose(w2_conv[:, :, 0, 0]).astype(jnp.float32)   # (Cr, C)
    # Stream x in its own dtype (bf16 halves HBM bytes); accumulation is f32 in-kernel.
    x_flat = x.reshape(N, C, HW)

    TN, hw_tile = _choose_tiling(N, C, HW, itemsize, n_tile, hw_tile)
    n_blocks = pl.cdiv(N, TN)
    hw_blocks = pl.cdiv(HW, hw_tile)
    cw = 128 if hw_tile % 128 == 0 else hw_tile

    kernel = _make_kernel(TN, C, HW, hw_tile, hw_blocks, 1.0 / float(HW))

    # VMEM budget: 2x double-buffered x blocks + lane-wide accumulators + weights/out
    # + slack; ceiling derived from the actual chip (v7x: 64 MiB, v5e/v6e: 128 MiB).
    vmem_cap = 64 << 20
    try:
        cap = getattr(pltpu.get_tpu_info(), "vmem_capacity_bytes", None)
        if cap:
            vmem_cap = int(cap)
    except Exception:
        pass  # no TPU visible at trace time -> assume the smallest (v7x)
    vmem_ceiling = min(vmem_cap * 3 // 4, 100 << 20)
    cp = _round_up(C, 8)
    x_block_bytes = TN * cp * hw_tile * itemsize
    acc_bytes = 2 * TN * cp * _round_up(cw, 128) * 4
    small_bytes = 4 * (2 * C * Cr + TN * C) + (2 << 20)
    vmem_limit = int(min(max(2 * x_block_bytes + acc_bytes + small_bytes, 32 << 20),
                         vmem_ceiling))

    # Advisory cost: HBM-bandwidth bound on reading x.
    cost = pl.CostEstimate(
        flops=2 * N * C * HW + 8 * N * C * Cr,
        transcendentals=N * C,
        bytes_accessed=N * C * HW * itemsize + (2 * C * Cr + N * C) * 4,
    )

    out = pl.pallas_call(
        kernel,
        out_shape=jax.ShapeDtypeStruct((N, 1, C), x.dtype),
        grid_spec=pltpu.PrefetchScalarGridSpec(
            num_scalar_prefetch=0,
            grid=(n_blocks, hw_blocks),
            in_specs=[
                # Streamed input (default double buffering; large lane-dense blocks).
                pl.BlockSpec((TN, C, hw_tile), lambda nb, hb: (nb, 0, hb)),
                # Tiny weights, constant block -> stay resident in VMEM.
                pl.BlockSpec((C, Cr), lambda nb, hb: (0, 0)),
                pl.BlockSpec((Cr, C), lambda nb, hb: (0, 0)),
            ],
            out_specs=pl.BlockSpec((TN, 1, C), lambda nb, hb: (nb, 0, 0)),
            scratch_shapes=[
                pltpu.VMEM((TN, C, cw), jnp.float32),   # lane-wide running sum
                pltpu.VMEM((TN, C, cw), jnp.float32),   # lane-wide running max
            ],
        ),
        compiler_params=pltpu.CompilerParams(
            dimension_semantics=("parallel", "arbitrary"),
            vmem_limit_bytes=vmem_limit,
        ),
        cost_estimate=cost,
    )(x_flat, w1, w2)

    return out.reshape(N, C, 1, 1)


def _xavier_normal(key, shape, gain):
    # nn.init.xavier_normal_ for Conv2d weight (out, in, 1, 1):
    # std = gain * sqrt(2 / (fan_in + fan_out)), fan_* = channels * kernel_area.
    fan_out, fan_in = shape[0] * shape[2] * shape[3], shape[1] * shape[2] * shape[3]
    std = gain * math.sqrt(2.0 / (fan_in + fan_out))
    return std * jax.random.normal(key, shape, dtype=jnp.float32)


def _reference(x, w1_conv, w2_conv):
    avg = jnp.mean(x, axis=(2, 3))
    mx = jnp.max(x, axis=(2, 3))
    w1 = jnp.transpose(w1_conv[:, :, 0, 0])
    w2 = jnp.transpose(w2_conv[:, :, 0, 0])
    mlp = lambda p: jnp.maximum(p @ w1, 0.0) @ w2
    return jax.nn.sigmoid(mlp(avg) + mlp(mx)).reshape(x.shape[0], x.shape[1], 1, 1)


if __name__ == "__main__":
    key = jax.random.PRNGKey(0)
    k_x, k_w1, k_w2, k_x2 = jax.random.split(key, 4)

    N, C, H, W = 2, 16, 16, 16
    ratio = 8
    Cr = C // ratio

    x = jax.random.normal(k_x, (N, C, H, W), dtype=jnp.float32)
    w1_conv = _xavier_normal(k_w1, (Cr, C, 1, 1), gain=0.02)  # Conv2d(C -> C//ratio, 1, bias=False)
    w2_conv = _xavier_normal(k_w2, (C, Cr, 1, 1), gain=0.02)  # Conv2d(C//ratio -> C, 1, bias=False)
    ref = _reference(x, w1_conv, w2_conv)

    # 1) Default tiling (single HW tile, batch split into two parallel blocks).
    out = channel_attention(x, w1_conv, w2_conv)
    jax.block_until_ready(out)
    assert jnp.allclose(out, ref, atol=1e-5, rtol=1e-5)

    # 2) Forced multi-tile HW reduction (exercises the running accumulators).
    out2 = channel_attention(x, w1_conv, w2_conv, hw_tile=128)
    jax.block_until_ready(out2)
    assert jnp.allclose(out2, ref, atol=1e-5, rtol=1e-5)

    # 3) Larger batch + non-128-divisible spatial extent (9, 16, 20, 20):
    #    partial N block, default single masked tile, and forced multi-tile path.
    x_big = jax.random.normal(k_x2, (9, C, 20, 20), dtype=jnp.float32)
    ref_big = _reference(x_big, w1_conv, w2_conv)
    out3 = channel_attention(x_big, w1_conv, w2_conv)                 # hw_tile=512, masked tail
    jax.block_until_ready(out3)
    assert jnp.allclose(out3, ref_big, atol=1e-5, rtol=1e-5)
    out4 = channel_attention(x_big, w1_conv, w2_conv, hw_tile=128)    # 4 HW tiles, masked last
    jax.block_until_ready(out4)
    assert jnp.allclose(out4, ref_big, atol=1e-5, rtol=1e-5)

    # 4) bf16 activations stream at half the HBM bytes; accumulation stays f32.
    x_bf16 = x_big.astype(jnp.bfloat16)
    ref_bf16 = _reference(x_bf16.astype(jnp.float32), w1_conv, w2_conv)
    out5 = channel_attention(x_bf16, w1_conv, w2_conv).astype(jnp.float32)
    jax.block_until_ready(out5)
    assert jnp.allclose(out5, ref_bf16, atol=2e-2, rtol=2e-2)

    print("KERNEL_OK")
</pallas_src>

<mosaic_0001>
module attributes {stable_mosaic.version = 11 : i64} {
  func.func @kernel(%arg0: i32, %arg1: i32, %arg2: memref<1x16x256xf32, #tpu.memory_space<vmem>>, %arg3: memref<16x2xf32, #tpu.memory_space<vmem>>, %arg4: memref<2x16xf32, #tpu.memory_space<vmem>>, %arg5: memref<1x1x16xf32, #tpu.memory_space<vmem>>, %arg6: memref<1x16x128xf32, #tpu.memory_space<vmem>>, %arg7: memref<1x16x128xf32, #tpu.memory_space<vmem>>) attributes {dimension_semantics = [#tpu.dimension_semantics<parallel>, #tpu.dimension_semantics<arbitrary>], iteration_bounds = array<i64: 2, 1>, scalar_prefetch = 0 : i64, scratch_operands = 2 : i64, tpu.core_type = #tpu.core_type<tc>, window_params = [{transform_indices = @transform_0, window_bounds = array<i64: 1, 16, 256>}, {pipeline_mode = #tpu.pipeline_mode<synchronous>, transform_indices = @transform_1, window_bounds = array<i64: 16, 2>}, {pipeline_mode = #tpu.pipeline_mode<synchronous>, transform_indices = @transform_2, window_bounds = array<i64: 2, 16>}, {transform_indices = @transform_3, window_bounds = array<i64: 1, 1, 16>}]} {
    %c0_i32 = arith.constant 0 : i32
    %0 = arith.cmpi eq, %arg1, %c0_i32 : i32
    %1 = arith.extui %0 : i1 to i32
    %c0_i32_0 = arith.constant 0 : i32
    %2 = arith.cmpi ne, %1, %c0_i32_0 : i32
    scf.if %2 {
      %cst = arith.constant 0.000000e+00 : f32
      %20 = vector.broadcast %cst : f32 to vector<1x16x128xf32>
      %c0_31 = arith.constant 0 : index
      %c0_32 = arith.constant 0 : index
      %c0_33 = arith.constant 0 : index
      %21 = vector.load %arg6[%c0_31, %c0_32, %c0_33] : memref<1x16x128xf32, #tpu.memory_space<vmem>>, vector<1x16x128xf32>
      tpu.vector_store %arg6[%c0_31, %c0_32, %c0_33], %20 {strides = array<i32>} : memref<1x16x128xf32, #tpu.memory_space<vmem>>, vector<1x16x128xf32>,
      %cst_34 = arith.constant 0xFF800000 : f32
      %22 = vector.broadcast %cst_34 : f32 to vector<1x16x128xf32>
      %c0_35 = arith.constant 0 : index
      %c0_36 = arith.constant 0 : index
      %c0_37 = arith.constant 0 : index
      %23 = vector.load %arg7[%c0_35, %c0_36, %c0_37] : memref<1x16x128xf32, #tpu.memory_space<vmem>>, vector<1x16x128xf32>
      tpu.vector_store %arg7[%c0_35, %c0_36, %c0_37], %22 {strides = array<i32>} : memref<1x16x128xf32, #tpu.memory_space<vmem>>, vector<1x16x128xf32>,
    } else {
    }
    %c0 = arith.constant 0 : index
    %c0_1 = arith.constant 0 : index
    %c0_2 = arith.constant 0 : index
    %3 = vector.load %arg2[%c0, %c0_1, %c0_2] : memref<1x16x256xf32, #tpu.memory_space<vmem>>, vector<1x16x128xf32>
    %c0_3 = arith.constant 0 : index
    %c0_4 = arith.constant 0 : index
    %c0_5 = arith.constant 0 : index
    %4 = vector.load %arg6[%c0_3, %c0_4, %c0_5] : memref<1x16x128xf32, #tpu.memory_space<vmem>>, vector<1x16x128xf32>
    %5 = arith.addf %4, %3 : vector<1x16x128xf32>
    %c0_6 = arith.constant 0 : index
    %c0_7 = arith.constant 0 : index
    %c0_8 = arith.constant 0 : index
    %6 = vector.load %arg6[%c0_6, %c0_7, %c0_8] : memref<1x16x128xf32, #tpu.memory_space<vmem>>, vector<1x16x128xf32>
    tpu.vector_store %arg6[%c0_6, %c0_7, %c0_8], %5 {strides = array<i32>} : memref<1x16x128xf32, #tpu.memory_space<vmem>>, vector<1x16x128xf32>,
    %c0_9 = arith.constant 0 : index
    %c0_10 = arith.constant 0 : index
    %c0_11 = arith.constant 0 : index
    %7 = vector.load %arg7[%c0_9, %c0_10, %c0_11] : memref<1x16x128xf32, #tpu.memory_space<vmem>>, vector<1x16x128xf32>
    %8 = arith.maximumf %7, %3 : vector<1x16x128xf32>
    %c0_12 = arith.constant 0 : index
    %c0_13 = arith.constant 0 : index
    %c0_14 = arith.constant 0 : index
    %9 = vector.load %arg7[%c0_12, %c0_13, %c0_14] : memref<1x16x128xf32, #tpu.memory_space<vmem>>, vector<1x16x128xf32>
    tpu.vector_store %arg7[%c0_12, %c0_13, %c0_14], %8 {strides = array<i32>} : memref<1x16x128xf32, #tpu.memory_space<vmem>>, vector<1x16x128xf32>,
    %c0_15 = arith.constant 0 : index
    %c0_16 = arith.constant 0 : index
    %c128 = arith.constant 128 : index
    %10 = vector.load %arg2[%c0_15, %c0_16, %c128] : memref<1x16x256xf32, #tpu.memory_space<vmem>>, vector<1x16x128xf32>
    %c0_17 = arith.constant 0 : index
    %c0_18 = arith.constant 0 : index
    %c0_19 = arith.constant 0 : index
    %11 = vector.load %arg6[%c0_17, %c0_18, %c0_19] : memref<1x16x128xf32, #tpu.memory_space<vmem>>, vector<1x16x128xf32>
    %12 = arith.addf %11, %10 : vector<1x16x128xf32>
    %c0_20 = arith.constant 0 : index
    %c0_21 = arith.constant 0 : index
    %c0_22 = arith.constant 0 : index
    %13 = vector.load %arg6[%c0_20, %c0_21, %c0_22] : memref<1x16x128xf32, #tpu.memory_space<vmem>>, vector<1x16x128xf32>
    tpu.vector_store %arg6[%c0_20, %c0_21, %c0_22], %12 {strides = array<i32>} : memref<1x16x128xf32, #tpu.memory_space<vmem>>, vector<1x16x128xf32>,
    %c0_23 = arith.constant 0 : index
    %c0_24 = arith.constant 0 : index
    %c0_25 = arith.constant 0 : index
    %14 = vector.load %arg7[%c0_23, %c0_24, %c0_25] : memref<1x16x128xf32, #tpu.memory_space<vmem>>, vector<1x16x128xf32>
    %15 = arith.maximumf %14, %10 : vector<1x16x128xf32>
    %c0_26 = arith.constant 0 : index
    %c0_27 = arith.constant 0 : index
    %c0_28 = arith.constant 0 : index
    %16 = vector.load %arg7[%c0_26, %c0_27, %c0_28] : memref<1x16x128xf32, #tpu.memory_space<vmem>>, vector<1x16x128xf32>
    tpu.vector_store %arg7[%c0_26, %c0_27, %c0_28], %15 {strides = array<i32>} : memref<1x16x128xf32, #tpu.memory_space<vmem>>, vector<1x16x128xf32>,
    %c0_i32_29 = arith.constant 0 : i32
    %17 = arith.cmpi eq, %arg1, %c0_i32_29 : i32
    %18 = arith.extui %17 : i1 to i32
    %c0_i32_30 = arith.constant 0 : i32
    %19 = arith.cmpi ne, %18, %c0_i32_30 : i32
    scf.if %19 {
      %c0_31 = arith.constant 0 : index
      %c0_32 = arith.constant 0 : index
      %c0_33 = arith.constant 0 : index
      %20 = vector.load %arg6[%c0_31, %c0_32, %c0_33] : memref<1x16x128xf32, #tpu.memory_space<vmem>>, vector<1x16x128xf32>
      %cst = arith.constant dense<0.000000e+00> : vector<1x16xf32>
      %21 = vector.multi_reduction <add>, %20, %cst [2] : vector<1x16x128xf32> to vector<1x16xf32>
      %cst_34 = arith.constant 3.906250e-03 : f32
      %22 = vector.broadcast %cst_34 : f32 to vector<1x16xf32>
      %23 = arith.mulf %21, %22 : vector<1x16xf32>
      %c0_35 = arith.constant 0 : index
      %c0_36 = arith.constant 0 : index
      %c0_37 = arith.constant 0 : index
      %24 = vector.load %arg7[%c0_35, %c0_36, %c0_37] : memref<1x16x128xf32, #tpu.memory_space<vmem>>, vector<1x16x128xf32>
      %cst_38 = arith.constant dense<0xFF800000> : vector<1x16xf32>
      %25 = vector.multi_reduction <maximumf>, %24, %cst_38 [2] : vector<1x16x128xf32> to vector<1x16xf32>
      %26 = tpu.concatenate %23, %25 in 0 : vector<1x16xf32>, vector<1x16xf32> -> vector<2x16xf32>
      %c0_39 = arith.constant 0 : index
      %c0_40 = arith.constant 0 : index
      %27 = vector.load %arg3[%c0_39, %c0_40] : memref<16x2xf32, #tpu.memory_space<vmem>>, vector<16x2xf32>
      %cst_41 = arith.constant dense<0.000000e+00> : vector<2x2xf32>
      %28 = tpu.matmul %26, %27, %cst_41 {dimension_numbers = #tpu.dot_dimension_numbers<[1], [0], [0], [1], [0, 0, 1, 1], [], []>} : vector<2x16xf32>, vector<16x2xf32>, vector<2x2xf32> -> vector<2x2xf32>
      %cst_42 = arith.constant 0.000000e+00 : f32
      %29 = vector.broadcast %cst_42 : f32 to vector<2x2xf32>
      %30 = arith.maximumf %28, %29 : vector<2x2xf32>
      %c0_43 = arith.constant 0 : index
      %c0_44 = arith.constant 0 : index
      %31 = vector.load %arg4[%c0_43, %c0_44] : memref<2x16xf32, #tpu.memory_space<vmem>>, vector<2x16xf32>
      %cst_45 = arith.constant dense<0.000000e+00> : vector<2x16xf32>
      %32 = tpu.matmul %30, %31, %cst_45 {dimension_numbers = #tpu.dot_dimension_numbers<[1], [0], [0], [1], [0, 0, 1, 1], [], []>} : vector<2x2xf32>, vector<2x16xf32>, vector<2x16xf32> -> vector<2x16xf32>
      %33 = vector.extract_strided_slice %32 {offsets = [0, 0], sizes = [1, 16], strides = [1, 1]} : vector<2x16xf32> to vector<1x16xf32>
      %34 = vector.extract_strided_slice %32 {offsets = [1, 0], sizes = [1, 16], strides = [1, 1]} : vector<2x16xf32> to vector<1x16xf32>
      %35 = arith.addf %33, %34 : vector<1x16xf32>
      %36 = arith.negf %35 : vector<1x16xf32>
      %37 = math.exp %36 : vector<1x16xf32>
      %cst_46 = arith.constant 1.000000e+00 : f32
      %38 = vector.broadcast %cst_46 : f32 to vector<1x16xf32>
      %39 = arith.addf %38, %37 : vector<1x16xf32>
      %40 = arith.divf %38, %39 : vector<1x16xf32>
      %41 = vector.shape_cast %40 : vector<1x16xf32> to vector<1x1x16xf32>
      %c0_47 = arith.constant 0 : index
      %c0_48 = arith.constant 0 : index
      %c0_49 = arith.constant 0 : index
      %42 = vector.load %arg5[%c0_47, %c0_48, %c0_49] : memref<1x1x16xf32, #tpu.memory_space<vmem>>, vector<1x1x16xf32>
      tpu.vector_store %arg5[%c0_47, %c0_48, %c0_49], %41 {strides = array<i32>} : memref<1x1x16xf32, #tpu.memory_space<vmem>>, vector<1x1x16xf32>,
    } else {
    }
    return
  }
  func.func @transform_0(%arg0: i32, %arg1: i32) -> (i32, i32, i32) {
    %c0_i32 = arith.constant 0 : i32
    %c0_i32_0 = arith.constant 0 : i32
    return %arg0, %c0_i32, %arg1 : i32, i32, i32
  }
  func.func @transform_1(%arg0: i32, %arg1: i32) -> (i32, i32) {
    %c0_i32 = arith.constant 0 : i32
    %c0_i32_0 = arith.constant 0 : i32
    %c0_i32_1 = arith.constant 0 : i32
    return %c0_i32, %c0_i32_0 : i32, i32
  }
  func.func @transform_2(%arg0: i32, %arg1: i32) -> (i32, i32) {
    %c0_i32 = arith.constant 0 : i32
    %c0_i32_0 = arith.constant 0 : i32
    %c0_i32_1 = arith.constant 0 : i32
    return %c0_i32, %c0_i32_0 : i32, i32
  }
  func.func @transform_3(%arg0: i32, %arg1: i32) -> (i32, i32, i32) {
    %c0_i32 = arith.constant 0 : i32
    %c0_i32_0 = arith.constant 0 : i32
    %c0_i32_1 = arith.constant 0 : i32
    return %arg0, %c0_i32, %c0_i32_0 : i32, i32, i32
  }
}

</mosaic_0001>

<llo_original>
// kernel: tpu_custom_call.1
$region0: #{tpu_custom_call.1}
  #allocation0 [shape = 'u32[]', space=smem, size = 0x4, offset = 0x4, fixed_abs, tag = 'smem constant byte address 0x4 - core index']
  #allocation1 [shape = 'u32[144,128]{1,0:T(1,128)}', space=vmem, size = 0x12000, scoped, tag = 'internal scratch']
  #allocation2 [shape = 'f32[1,16,128]{2,1,0:T(8,128)}', space=vmem, size = 0x2000, scoped, tag = 'scratch operand']
  #allocation3 [shape = 'f32[1,16,128]{2,1,0:T(8,128)}', space=vmem, size = 0x2000, scoped, tag = 'scratch operand']
  %s0 = inlined_call_operand.hbm [shape: f32[2,16,256], index: 0, kind: input, shape index: {}]
  %s1 = inlined_call_operand.vmem [shape: f32[16,2], index: 1, kind: input, shape index: {}]
  %s2 = inlined_call_operand.vmem [shape: f32[2,16], index: 2, kind: input, shape index: {}]
  %s3 = inlined_call_operand.hbm [shape: f32[2,1,16], index: 3, kind: output, shape index: {}]
  %s4 = sld [smem:[#allocation0]]
  $region57: #{tpu_custom_call.1} parent=0
    _
  %s6 = ssub.s32 1, %s4
  %s7 = scalar_select 0, %s6, %s4
  $region1: #{tpu_custom_call.1} parent=0
    #allocation4 [shape = 'u8[32768]{0}', space=vmem, size = 0x8000, scoped, tag = 'input window, operand 0']
    #allocation5 [shape = 's32[2]{0}', space=sflag, size = 0x8, scoped, tag = 'scoped memory for tpu_custom_call.1']
    #allocation6 [shape = 's32[2]{0}', space=sflag, size = 0x8, scoped, tag = 'scoped memory for tpu_custom_call.1']
    #allocation7 [shape = 'u8[1024]{0}', space=vmem, size = 0x400, scoped, tag = 'output window, operand 0']
    %8 = vsyncpa [#allocation5], 0
    %s9 = scalar_lea.sflag [#allocation5], 1
    %10 = vsyncpa %s9, 0
    %11 = vsyncpa [#allocation6], 0
    %s12 = scalar_lea.sflag [#allocation6], 1
    %13 = vsyncpa %s12, 0
    loop: start=0, step=1, limit=4
    $region2: #{tpu_custom_call.1} parent=1 // loop_pre_header
      _
    $region3: #{tpu_custom_call.1} parent=1 // loop_header
      %s15 = sphi 0, %s19
      %p16 = scmp.ge.s32.totalorder %s15, 4
      %s22 = sphi 0, %s34
      %s23 = sphi 0, %s30
      %s24 = sphi 0, %s22
      %s25 = sphi 0, %s23
      %s26 = sphi 0, %s24
      %s27 = sphi 0, %s25
      %s39 = sphi 0, %s41
      %s42 = sphi 0, %s39
      %s43 = sphi 0, %s42
      %s59 = sphi 0, %s43
      %s63 = sphi 0, %s63
      %s65 = sphi 0, %s63
      %s66 = sphi 0, %s65
      %s80 = sphi 0, %s66
      %s84 = sphi 0, %s84
      %s86 = sphi 0, %s84
      %s87 = sphi 0, %s86
      %s101 = sphi 0, %s87
      %s107 = sphi 0, %s109
      %s110 = sphi 0, %s107
      %s111 = sphi 0, %s110
      %s127 = sphi 0, %s111
    $region4: #{tpu_custom_call.1} parent=1 // loop_header_branch
      %18 = sbr.rel (%p16) target = $region8
    $region5: #{tpu_custom_call.1} parent=1 // loop_body
      %s20 = ssub.s32 %s15, 1
      %s21 = ssub.s32 %s15, 2
      %s28 = sadd.s32 1, %s23
      %p29 = scmp.ge.s32.totalorder %s28, 1
      %s30 = scalar_select %p29, 0, %s28
      %s31 = sadd.s32 1, %s22
      %s32 = scalar_select %p29, %s31, %s22
      %p33 = scmp.ge.s32.totalorder %s32, 2
      %s34 = scalar_select %p33, 0, %s32
      %s35 = ssub.s32 %s22, %s34
      %s36 = ssub.s32 %s23, %s30
      %s37 = sor.u32 %s35, %s36
      %p38 = scmp.eq.s32.totalorder %s37, 0
      %s40 = sadd.s32 %s39, 1
      %s41 = scalar_select %p38, %s39, %s40
      %p44 = pneg %p38
      %p45 = scmp.eq.s32.totalorder %s15, 1
      %p46 = por %p44, %p45
      %p47 = scmp.ne.s32.totalorder %s39, %s42
      %p48 = scmp.eq.s32.totalorder %s15, 0
      %p49 = por %p47, %p48
      %p50 = scmp.ne.s32.totalorder %s39, %s42
      %p51 = scmp.eq.s32.totalorder %s20, 1
      %p52 = por %p50, %p51
      %p53 = scmp.ne.s32.totalorder %s42, %s43
      %p54 = scmp.eq.s32.totalorder %s20, 0
      %p55 = por %p53, %p54
      %p56 = scmp.ne.s32.totalorder %s42, %s43
      %p57 = scmp.eq.s32.totalorder %s21, 1
      %p58 = por %p56, %p57
      %p60 = scmp.ne.s32.totalorder %s43, %s59
      %p61 = scmp.eq.s32.totalorder %s21, 0
      %p62 = por %p60, %p61
      %s64 = sadd.s32 %s63, 1
      %p67 = scmp.eq.s32.totalorder %s15, 1
      %p68 = scmp.ne.s32.totalorder %s63, %s65
      %p69 = scmp.eq.s32.totalorder %s15, 0
      %p70 = por %p68, %p69
      %p71 = scmp.ne.s32.totalorder %s63, %s65
      %p72 = scmp.eq.s32.totalorder %s20, 1
      %p73 = por %p71, %p72
      %p74 = scmp.ne.s32.totalorder %s65, %s66
      %p75 = scmp.eq.s32.totalorder %s20, 0
      %p76 = por %p74, %p75
      %p77 = scmp.ne.s32.totalorder %s65, %s66
      %p78 = scmp.eq.s32.totalorder %s21, 1
      %p79 = por %p77, %p78
      %p81 = scmp.ne.s32.totalorder %s66, %s80
      %p82 = scmp.eq.s32.totalorder %s21, 0
      %p83 = por %p81, %p82
      %s85 = sadd.s32 %s84, 1
      %p88 = scmp.eq.s32.totalorder %s15, 1
      %p89 = scmp.ne.s32.totalorder %s84, %s86
      %p90 = scmp.eq.s32.totalorder %s15, 0
      %p91 = por %p89, %p90
      %p92 = scmp.ne.s32.totalorder %s84, %s86
      %p93 = scmp.eq.s32.totalorder %s20, 1
      %p94 = por %p92, %p93
      %p95 = scmp.ne.s32.totalorder %s86, %s87
      %p96 = scmp.eq.s32.totalorder %s20, 0
      %p97 = por %p95, %p96
      %p98 = scmp.ne.s32.totalorder %s86, %s87
      %p99 = scmp.eq.s32.totalorder %s21, 1
      %p100 = por %p98, %p99
      %p102 = scmp.ne.s32.totalorder %s87, %s101
      %p103 = scmp.eq.s32.totalorder %s21, 0
      %p104 = por %p102, %p103
      %s105 = ssub.s32 %s22, %s34
      %p106 = scmp.eq.s32.totalorder %s105, 0
      %s108 = sadd.s32 %s107, 1
      %s109 = scalar_select %p106, %s107, %s108
      %p112 = pneg %p106
      %p113 = scmp.eq.s32.totalorder %s15, 1
      %p114 = por %p112, %p113
      %p115 = scmp.ne.s32.totalorder %s107, %s110
      %p116 = scmp.eq.s32.totalorder %s15, 0
      %p117 = por %p115, %p116
      %p118 = scmp.ne.s32.totalorder %s107, %s110
      %p119 = scmp.eq.s32.totalorder %s20, 1
      %p120 = por %p118, %p119
      %p121 = scmp.ne.s32.totalorder %s110, %s111
      %p122 = scmp.eq.s32.totalorder %s20, 0
      %p123 = por %p121, %p122
      %p124 = scmp.ne.s32.totalorder %s110, %s111
      %p125 = scmp.eq.s32.totalorder %s21, 1
      %p126 = por %p124, %p125
      %p128 = scmp.ne.s32.totalorder %s111, %s127
      %p129 = scmp.eq.s32.totalorder %s21, 0
      %p130 = por %p128, %p129
      %p131 = scmp.le.s32.totalorder 1, %s15
      %p132 = scmp.lt.s32.totalorder %s15, 3
      %p133 = pnand %p131, %p132
      %p134 = pneg %p133
      // Predicated region
      $region9: #{tpu_custom_call.1} parent=5 // pred_check
        _
      $region10: #{tpu_custom_call.1} parent=5 // pred_check_branch
        %136 = sbr.rel (%p133) target = $region12
      $region11: #{tpu_custom_call.1} parent=5 // pred_region
        %s137 = ssub.s32 %s15, 1
        // Predicated region
        $region13: #{tpu_custom_call.1} parent=11 // pred_check
          %p138 = pneg %p76
        $region14: #{tpu_custom_call.1} parent=11 // pred_check_branch
          %140 = sbr.rel (%p138) target = $region16
        $region15: #{tpu_custom_call.1} parent=11 // pred_region
          _
        $region16: #{tpu_custom_call.1} parent=11 // pred_fallthru
          _
        // Predicated region
        $region17: #{tpu_custom_call.1} parent=11 // pred_check
          %p141 = pneg %p97
        $region18: #{tpu_custom_call.1} parent=11 // pred_check_branch
          %143 = sbr.rel (%p141) target = $region20
        $region19: #{tpu_custom_call.1} parent=11 // pred_region
          _
        $region20: #{tpu_custom_call.1} parent=11 // pred_fallthru
          _
      $region12: #{tpu_custom_call.1} parent=5 // pred_fallthru
        _
      %p144 = scmp.lt.s32.totalorder %s15, 2
      // Predicated region
      $region21: #{tpu_custom_call.1} parent=5 // pred_check
        %p145 = pneg %p144
      $region22: #{tpu_custom_call.1} parent=5 // pred_check_branch
        %147 = sbr.rel (%p145) target = $region24
      $region23: #{tpu_custom_call.1} parent=5 // pred_region
        // Predicated region
        $region25: #{tpu_custom_call.1} parent=23 // pred_check
          %p148 = pneg %p49
        $region26: #{tpu_custom_call.1} parent=23 // pred_check_branch
          %150 = sbr.rel (%p148) target = $region28
        $region27: #{tpu_custom_call.1} parent=23 // pred_region
          %s151 = sand.u32 %s39, 1
          %s152 = scalar_lea.sflag [#allocation5], %s151
          %s153 = sand.u32 %s39, 1
          %s154 = smul.addr %s153, 32
          %s155 = scalar_lea.vmem [#allocation4], %s154
          %s156 = smul.u32 2, %s23
          %s158 = ssub.s32 512, 512
          %159 = vsyncadd %s152, %s158
          %s160 = smul.addr %s22, 4
          %s161 = sadd.s32 %s156, %s160
          %s162 = smul.addr %s161, 128
          %s163 = scalar_lea.hbm %s0, %s162
          %s164 = sshll.u32 %s155, 4
          %s165 = int_to_ptr.vmem [resolvable:$true] %s164
          %170 = dma.hbm_to_vmem [thread:$0]  %s163, 512, %s165, %s152, 256, 256, 16
        $region28: #{tpu_custom_call.1} parent=23 // pred_fallthru
          _
      $region24: #{tpu_custom_call.1} parent=5 // pred_fallthru
        _
      %p171 = scmp.le.s32.totalorder 1, %s15
      %p172 = scmp.lt.s32.totalorder %s15, 3
      %p173 = pnand %p171, %p172
      %p174 = pneg %p173
      // Predicated region
      $region29: #{tpu_custom_call.1} parent=5 // pred_check
        _
      $region30: #{tpu_custom_call.1} parent=5 // pred_check_branch
        %176 = sbr.rel (%p173) target = $region32
      $region31: #{tpu_custom_call.1} parent=5 // pred_region
        %s177 = ssub.s32 %s15, 1
        %s178 = sand.u32 %s42, 1
        %s179 = scalar_lea.sflag [#allocation5], %s178
        %s180 = sand.u32 %s42, 1
        %s181 = smul.addr %s180, 32
        %s182 = scalar_lea.vmem [#allocation4], %s181
        // Predicated region
        $region33: #{tpu_custom_call.1} parent=31 // pred_check
          %p183 = pneg %p55
        $region34: #{tpu_custom_call.1} parent=31 // pred_check_branch
          %185 = sbr.rel (%p183) target = $region36
        $region35: #{tpu_custom_call.1} parent=31 // pred_region
          %186 = dma.done %s179, 512
        $region36: #{tpu_custom_call.1} parent=31 // pred_fallthru
          _
        %s187 = sand.u32 %s42, 1
        %s188 = scalar_lea.sflag [#allocation5], %s187
        %s189 = sand.u32 %s42, 1
        %s190 = smul.addr %s189, 32
        %s191 = scalar_lea.vmem [#allocation4], %s190
        %p192 = pneg %p55
        %p193 = pneg %p52
        %p194 = pneg %p76
        %p195 = pneg %p73
        %p196 = pneg %p97
        %p197 = pneg %p94
        %p198 = pneg %p123
        %p199 = pneg %p120
        %s200 = sand.u32 %s110, 1
        %s201 = scalar_lea.sflag [#allocation6], %s200
        %s202 = sand.u32 %s110, 1
        %s203 = scalar_lea.vmem [#allocation7], %s202
        %s204 = smul.u32 2, %s25
        %p205 = scmp.eq.s32.totalorder %s25, 0
        // Predicated region
        $region37: #{tpu_custom_call.1} parent=31 // pred_check
          %p206 = pneg %p205
        $region38: #{tpu_custom_call.1} parent=31 // pred_check_branch
          %208 = sbr.rel (%p206) target = $region40
        $region39: #{tpu_custom_call.1} parent=31 // pred_region
          %209 = vst [vmem:[#allocation2] sm:$0xff] 0.0
          %210 = vst [vmem:[#allocation2 + $0x8] sm:$0xff] 0.0
          %211 = vst [vmem:[#allocation3] sm:$0xff] -inf
          %212 = vst [vmem:[#allocation3 + $0x8] sm:$0xff] -inf
        $region40: #{tpu_custom_call.1} parent=31 // pred_fallthru
          _
        %v213 = vld [vmem:[%s182] sm:$0xff]
        %v214 = vld [vmem:[%s182 + $0x10] sm:$0xff]
        %v215 = vld [vmem:[#allocation2] sm:$0xff]
        %v216 = vld [vmem:[#allocation2 + $0x8] sm:$0xff]
        %v217 = vadd.f32 %v215, %v213
        %v218 = vadd.f32 %v216, %v214
        %219 = vst [vmem:[#allocation2] sm:$0xff] %v217
        %220 = vst [vmem:[#allocation2 + $0x8] sm:$0xff] %v218
        %v221 = vld [vmem:[#allocation3] sm:$0xff]
        %v222 = vld [vmem:[#allocation3 + $0x8] sm:$0xff]
        %v223 = vmax.f32 %v221, %v213
        %v224 = vmax.f32 %v222, %v214
        %225 = vst [vmem:[#allocation3] sm:$0xff] %v223
        %226 = vst [vmem:[#allocation3 + $0x8] sm:$0xff] %v224
        %v227 = vld [vmem:[%s182 + $0x8] sm:$0xff]
        %v228 = vld [vmem:[%s182 + $0x18] sm:$0xff]
        %v229 = vld [vmem:[#allocation2] sm:$0xff]
        %v230 = vld [vmem:[#allocation2 + $0x8] sm:$0xff]
        %v231 = vadd.f32 %v229, %v227
        %v232 = vadd.f32 %v230, %v228
        %233 = vst [vmem:[#allocation2] sm:$0xff] %v231
        %234 = vst [vmem:[#allocation2 + $0x8] sm:$0xff] %v232
        %v235 = vld [vmem:[#allocation3] sm:$0xff]
        %v236 = vld [vmem:[#allocation3 + $0x8] sm:$0xff]
        %v237 = vmax.f32 %v235, %v227
        %v238 = vmax.f32 %v236, %v228
        %239 = vst [vmem:[#allocation3] sm:$0xff] %v237
        %240 = vst [vmem:[#allocation3 + $0x8] sm:$0xff] %v238
        // Predicated region
        $region41: #{tpu_custom_call.1} parent=31 // pred_check
          %p241 = pneg %p205
        $region42: #{tpu_custom_call.1} parent=31 // pred_check_branch
          %243 = sbr.rel (%p241) target = $region44
        $region43: #{tpu_custom_call.1} parent=31 // pred_region
          %v244 = vld [vmem:[#allocation2] sm:$0xff]
          %v245 = vld [vmem:[#allocation2 + $0x8] sm:$0xff]
          %246 = vadd.xlane.f32.xlu0 %v244
          %v247 = vpop.xlane.xlu0 %246
          %248 = vadd.xlane.f32.xlu0 %v245
          %v249 = vpop.xlane.xlu0 %248
          %v250 = vmul.f32 %v247, 0.00390625
          %v251 = vmul.f32 %v249, 0.00390625
          %v252 = vld [vmem:[#allocation3] sm:$0xff]
          %v253 = vld [vmem:[#allocation3 + $0x8] sm:$0xff]
          %254 = vmax.xlane.f32.xlu0 %v252
          %v255 = vpop.xlane.xlu0 %254
          %256 = vmax.xlane.f32.xlu0 %v253
          %v257 = vpop.xlane.xlu0 %256
          %v260 = vlaneseq
          %v261 = vand.u32 %v260, 127
          %v262 = vlaneseq
          %v263 = vshrl.u32 %v262, 7
          %v264 = vsub.s32 %v261, %v263
          %v265 = vrot.slane %v250, %v264
          %v266 = vadd.s32 %v261, 4294967288
          %v267 = vlaneseq
          %v268 = vshrl.u32 %v267, 7
          %v269 = vsub.s32 %v266, %v268
          %v270 = vrot.slane %v251, %v269
          %vm271 = vcmask 130112
          %v272 = vsel %vm271, %v270, %v265
          %v276 = vlaneseq
          %v277 = vshrl.u32 %v276, 7
          %v278 = vsub.s32 %v261, %v277
          %v279 = vrot.slane %v255, %v278
          %v280 = vlaneseq
          %v281 = vshrl.u32 %v280, 7
          %v282 = vsub.s32 %v266, %v281
          %v283 = vrot.slane %v257, %v282
          %v284 = vsel %vm271, %v283, %v279
          %vm286 = vcmask 1040384
          %v287 = vsel %vm286, %v272, %v284
          %v288 = vld [vmem:[%s1] sm:$0xff]
          %v289 = vld [vmem:[%s1 + $0x8] sm:$0xff]
          %vm290 = vcmask 130048
          %v292 = vsel %vm290, %v287, 0
          %294 = vmatprep.subr.mxu0 0.0
          %295 = vmatpush1.msra.mxu0 0.0
          %296 = vmatprep.subr.mxu0 0.0
          %297 = vmatpush1.msra.mxu0 0.0
          %298 = vmatprep.subr.mxu0 0.0
          %299 = vmatpush1.msra.mxu0 0.0
          %300 = vmatprep.subr.mxu0 0.0
          %301 = vmatpush1.msra.mxu0 0.0
          %302 = vmatprep.subr.mxu0 0.0
          %303 = vmatpush1.msra.mxu0 0.0
          %304 = vmatprep.subr.mxu0 0.0
          %305 = vmatpush1.msra.mxu0 0.0
          %306 = vmatprep.subr.mxu0 0.0
          %307 = vmatpush1.msra.mxu0 0.0
          %308 = vmatprep.subr.mxu0 0.0
          %309 = vmatpush1.msra.mxu0 0.0
          %310 = vmatprep.subr.mxu0 0.0
          %311 = vmatpush1.msra.mxu0 0.0
          %312 = vmatprep.subr.mxu0 0.0
          %313 = vmatpush1.msra.mxu0 0.0
          %314 = vmatprep.subr.mxu0 0.0
          %315 = vmatpush1.msra.mxu0 0.0
          %316 = vmatprep.subr.mxu0 0.0
          %317 = vmatpush1.msra.mxu0 0.0
          %318 = vmatprep.subr.mxu0 0.0
          %319 = vmatpush1.msra.mxu0 0.0
          %320 = vmatprep.subr.mxu0 0.0
          %321 = vmatpush1.msra.mxu0 0.0
          %322 = vmatprep.subr.mxu0 0.0
          %323 = vmatpush1.msra.mxu0 %v289
          %324 = vmatprep.subr.mxu0 0.0
          %325 = vmatpush1.msra.mxu0 %v288
          %326 = vmatprep.subr.mxu0 0.0
          %327 = vmatpush2.msra.mxu0 0.0
          %328 = vmatprep.subr.mxu0 0.0
          %329 = vmatpush2.msra.mxu0 0.0
          %330 = vmatprep.subr.mxu0 0.0
          %331 = vmatpush2.msra.mxu0 0.0
          %332 = vmatprep.subr.mxu0 0.0
          %333 = vmatpush2.msra.mxu0 0.0
          %334 = vmatprep.subr.mxu0 0.0
          %335 = vmatpush2.msra.mxu0 0.0
          %336 = vmatprep.subr.mxu0 0.0
          %337 = vmatpush2.msra.mxu0 0.0
          %338 = vmatprep.subr.mxu0 0.0
          %339 = vmatpush2.msra.mxu0 0.0
          %340 = vmatprep.subr.mxu0 0.0
          %341 = vmatpush2.msra.mxu0 0.0
          %342 = vmatprep.subr.mxu0 0.0
          %343 = vmatpush2.msra.mxu0 0.0
          %344 = vmatprep.subr.mxu0 0.0
          %345 = vmatpush2.msra.mxu0 0.0
          %346 = vmatprep.subr.mxu0 0.0
          %347 = vmatpush2.msra.mxu0 0.0
          %348 = vmatprep.subr.mxu0 0.0
          %349 = vmatpush2.msra.mxu0 0.0
          %350 = vmatprep.subr.mxu0 0.0
          %351 = vmatpush2.msra.mxu0 0.0
          %352 = vmatprep.subr.mxu0 0.0
          %353 = vmatpush2.msra.mxu0 0.0
          %354 = vmatprep.subr.mxu0 0.0
          %355 = vmatpush2.msra.mxu0 0.0
          %356 = vmatprep.subr.mxu0 0.0
          %357 = vmatpush2.msra.mxu0 0.0
          %358 = vmatprep.mubr.f32.mxu0 0.0
          %359 = vmatmul.mubr.f32.gmra.mxu0 %v292
          %v360 = vpop.f32.mrf.mxu0
          %v361 = vadd.f32 0.0, %v360
          %v362 = vpop.f32.mrf.mxu0
          %363 = vdwg.mxu0
          %v364 = vmax.f32 %v361, 0.0
          %v365 = vld [vmem:[%s2] sm:$0x3]
          %vm366 = vcmask 15360
          %v368 = vsel %vm366, %v364, 0
          %vm370 = vcmask 1041408
          %v372 = vsel %vm370, %v365, 0
          %374 = vmatprep.subr.mxu0 0.0
          %375 = vmatpush1.msra.mxu0 0.0
          %376 = vmatprep.subr.mxu0 0.0
          %377 = vmatpush1.msra.mxu0 0.0
          %378 = vmatprep.subr.mxu0 0.0
          %379 = vmatpush1.msra.mxu0 0.0
          %380 = vmatprep.subr.mxu0 0.0
          %381 = vmatpush1.msra.mxu0 0.0
          %382 = vmatprep.subr.mxu0 0.0
          %383 = vmatpush1.msra.mxu0 0.0
          %384 = vmatprep.subr.mxu0 0.0
          %385 = vmatpush1.msra.mxu0 0.0
          %386 = vmatprep.subr.mxu0 0.0
          %387 = vmatpush1.msra.mxu0 0.0
          %388 = vmatprep.subr.mxu0 0.0
          %389 = vmatpush1.msra.mxu0 0.0
          %390 = vmatprep.subr.mxu0 0.0
          %391 = vmatpush1.msra.mxu0 0.0
          %392 = vmatprep.subr.mxu0 0.0
          %393 = vmatpush1.msra.mxu0 0.0
          %394 = vmatprep.subr.mxu0 0.0
          %395 = vmatpush1.msra.mxu0 0.0
          %396 = vmatprep.subr.mxu0 0.0
          %397 = vmatpush1.msra.mxu0 0.0
          %398 = vmatprep.subr.mxu0 0.0
          %399 = vmatpush1.msra.mxu0 0.0
          %400 = vmatprep.subr.mxu0 0.0
          %401 = vmatpush1.msra.mxu0 0.0
          %402 = vmatprep.subr.mxu0 0.0
          %403 = vmatpush1.msra.mxu0 0.0
          %404 = vmatprep.subr.mxu0 0.0
          %405 = vmatpush1.msra.mxu0 %v372
          %406 = vmatprep.subr.mxu0 0.0
          %407 = vmatpush2.msra.mxu0 0.0
          %408 = vmatprep.subr.mxu0 0.0
          %409 = vmatpush2.msra.mxu0 0.0
          %410 = vmatprep.subr.mxu0 0.0
          %411 = vmatpush2.msra.mxu0 0.0
          %412 = vmatprep.subr.mxu0 0.0
          %413 = vmatpush2.msra.mxu0 0.0
          %414 = vmatprep.subr.mxu0 0.0
          %415 = vmatpush2.msra.mxu0 0.0
          %416 = vmatprep.subr.mxu0 0.0
          %417 = vmatpush2.msra.mxu0 0.0
          %418 = vmatprep.subr.mxu0 0.0
          %419 = vmatpush2.msra.mxu0 0.0
          %420 = vmatprep.subr.mxu0 0.0
          %421 = vmatpush2.msra.mxu0 0.0
          %422 = vmatprep.subr.mxu0 0.0
          %423 = vmatpush2.msra.mxu0 0.0
          %424 = vmatprep.subr.mxu0 0.0
          %425 = vmatpush2.msra.mxu0 0.0
          %426 = vmatprep.subr.mxu0 0.0
          %427 = vmatpush2.msra.mxu0 0.0
          %428 = vmatprep.subr.mxu0 0.0
          %429 = vmatpush2.msra.mxu0 0.0
          %430 = vmatprep.subr.mxu0 0.0
          %431 = vmatpush2.msra.mxu0 0.0
          %432 = vmatprep.subr.mxu0 0.0
          %433 = vmatpush2.msra.mxu0 0.0
          %434 = vmatprep.subr.mxu0 0.0
          %435 = vmatpush2.msra.mxu0 0.0
          %436 = vmatprep.subr.mxu0 0.0
          %437 = vmatpush2.msra.mxu0 0.0
          %438 = vmatprep.mubr.f32.mxu0 0.0
          %439 = vmatmul.mubr.f32.gmra.mxu0 %v368
          %v440 = vpop.f32.mrf.mxu0
          %v441 = vadd.f32 0.0, %v440
          %v442 = vpop.f32.mrf.mxu0
          %443 = vdwg.mxu0
          %v445 = vrot.slane %v441, 1
          %v447 = vadd.f32 %v441, %v445
          %v448 = vxor.u32 %v447, 2147483648
          %v449 = vmul.f32 %v448, 1.442695
          %v450 = vpow.pop %v449
          %v451 = vadd.f32 %v450, 1.0
          %v452 = vrcp.pop %v451
          %v453 = vmul.f32 1.0, %v452
          %vm454 = vcmask 122880
          %455 = vst.msk [vmem:[%s203] sm:$0x1] %vm454, %v453
        $region44: #{tpu_custom_call.1} parent=31 // pred_fallthru
          _
        %s456 = sand.u32 %s110, 1
        %s457 = scalar_lea.sflag [#allocation6], %s456
        %s458 = sand.u32 %s110, 1
        %s459 = scalar_lea.vmem [#allocation7], %s458
        // Predicated region
        $region45: #{tpu_custom_call.1} parent=31 // pred_check
          %p460 = pneg %p120
        $region46: #{tpu_custom_call.1} parent=31 // pred_check_branch
          %462 = sbr.rel (%p460) target = $region48
        $region47: #{tpu_custom_call.1} parent=31 // pred_region
          %s464 = ssub.s32 16, 16
          %465 = vsyncadd %s457, %s464
          %s466 = smul.addr %s24, 16
          %s467 = scalar_lea.hbm %s3, %s466
          %s469 = sshll.u32 %s459, 4
          %s470 = int_to_ptr.vmem [resolvable:$true] %s469
          %472 = dma.vmem_to_hbm [thread:$0]  %s470, 16, %s467, %s457
        $region48: #{tpu_custom_call.1} parent=31 // pred_fallthru
          _
      $region32: #{tpu_custom_call.1} parent=5 // pred_fallthru
        _
      %p473 = scmp.le.s32.totalorder 2, %s15
      // Predicated region
      $region49: #{tpu_custom_call.1} parent=5 // pred_check
        %p474 = pneg %p473
      $region50: #{tpu_custom_call.1} parent=5 // pred_check_branch
        %476 = sbr.rel (%p474) target = $region52
      $region51: #{tpu_custom_call.1} parent=5 // pred_region
        %s477 = ssub.s32 %s15, 2
        // Predicated region
        $region53: #{tpu_custom_call.1} parent=51 // pred_check
          %p478 = pneg %p126
        $region54: #{tpu_custom_call.1} parent=51 // pred_check_branch
          %480 = sbr.rel (%p478) target = $region56
        $region55: #{tpu_custom_call.1} parent=51 // pred_region
          %s481 = sand.u32 %s111, 1
          %s482 = scalar_lea.sflag [#allocation6], %s481
          %s483 = sand.u32 %s111, 1
          %s484 = scalar_lea.vmem [#allocation7], %s483
          %485 = dma.done %s482, 16
        $region56: #{tpu_custom_call.1} parent=51 // pred_fallthru
          _
      $region52: #{tpu_custom_call.1} parent=5 // pred_fallthru
        _
    $region6: #{tpu_custom_call.1} parent=1 // loop_footer
      %s19 = sadd.s32 1, %s15
    $region7: #{tpu_custom_call.1} parent=1 // loop_footer_branch
      %14 = sbr.rel target = $region3
    $region8: #{tpu_custom_call.1} parent=1 // loop_exit
      _
    %486 = vsyncpa [#allocation5], 1
    %s487 = scalar_lea.sflag [#allocation5], 1
    %488 = vsyncpa %s487, 1
    %489 = vsyncpa [#allocation6], 1
    %s490 = scalar_lea.sflag [#allocation6], 1
    %491 = vsyncpa %s490, 1

</llo_original>
